<compile_context>
chip_gen: v5e
topology: v5e:2x2
jax: 0.10.0
libtpu: 0.0.40
codegen_flags: <defaults>
</compile_context>

<pallas_src>
import math

import jax
import jax.numpy as jnp
from jax.experimental import pallas as pl
from jax.experimental.pallas import tpu as pltpu


# ---------------------------------------------------------------------------
# Kernels
# ---------------------------------------------------------------------------

def _ffn_resident_kernel(x_ref, w1_ref, b1_ref, w2_ref, b2_ref, o_ref):
    """Whole-hidden step: both weight matrices stay resident in VMEM."""
    h = jnp.dot(x_ref[...], w1_ref[...], preferred_element_type=jnp.float32)
    h = jnp.maximum(h + b1_ref[...].astype(jnp.float32), 0.0)
    # TODO(synk): training-mode dropout (nn.Dropout with RNG) is omitted;
    # this matches eval-mode (identity) forward semantics.
    h = h.astype(x_ref.dtype)
    y = jnp.dot(h, w2_ref[...], preferred_element_type=jnp.float32)
    o_ref[...] = (y + b2_ref[...].astype(jnp.float32)).astype(o_ref.dtype)


def _ffn_tiled_kernel(x_ref, w1_ref, b1_ref, w2_ref, b2_ref, o_ref, acc_ref):
    """One (row-tile i, hidden-tile n) step of y = relu(x@W1+b1)@W2 + b2."""
    n = pl.program_id(1)

    @pl.when(n == 0)
    def _init():
        # Fold the output bias into the accumulator initialization.
        acc_ref[...] = jnp.broadcast_to(
            b2_ref[...].astype(jnp.float32), acc_ref.shape)

    h = jnp.dot(x_ref[...], w1_ref[...], preferred_element_type=jnp.float32)
    h = jnp.maximum(h + b1_ref[...].astype(jnp.float32), 0.0)
    # TODO(synk): training-mode dropout (nn.Dropout with RNG) is omitted;
    # this matches eval-mode (identity) forward semantics.
    h = h.astype(x_ref.dtype)

    acc_ref[...] += jnp.dot(h, w2_ref[...], preferred_element_type=jnp.float32)

    @pl.when(n == pl.num_programs(1) - 1)
    def _store():
        o_ref[...] = acc_ref[...].astype(o_ref.dtype)


# ---------------------------------------------------------------------------
# Tiling / budgeting helpers
# ---------------------------------------------------------------------------

def _round_up(x, m):
    return ((x + m - 1) // m) * m


def _device_generation():
    try:
        kind = jax.devices()[0].device_kind.lower()
    except Exception:
        return "unknown"
    if "v7" in kind or "7x" in kind:
        return "v7x"
    if "v6" in kind:
        return "v6e"
    if "v5" in kind:
        return "v5e"
    return "unknown"


def _gen_params(gen):
    """(preferred row tile, preferred hidden tile, usable VMEM budget bytes)."""
    if gen == "v6e":
        # 128 MiB physical VMEM; roofline threshold ~650 FLOP/byte -> big tm.
        return 1024, 512, 100 * 1024 * 1024
    if gen == "v5e":
        # 128 MiB physical; threshold ~240 -> tm ~512 suffices; modest tn.
        return 512, 256, 100 * 1024 * 1024
    if gen == "v7x":
        # 64 MiB physical per TC; threshold ~310 -> tm ~512, keep footprint small.
        return 512, 512, 48 * 1024 * 1024
    # Conservative default (fits any generation).
    return 512, 256, 48 * 1024 * 1024


def _resident_footprint(tm, d_model, d_middle, xb, wb):
    f = 2 * tm * d_model * xb            # x blocks (double-buffered)
    f += 2 * tm * d_model * xb           # out blocks
    f += 2 * d_model * d_middle * wb     # W1^T (allocated double-buffered)
    f += 2 * d_middle * d_model * wb     # W2^T
    f += 2 * (d_middle + d_model) * 4    # biases
    f += tm * d_middle * 4               # f32 intermediate h
    return f


def _tiled_footprint(tm, tn, d_model, xb, wb):
    f = 2 * tm * d_model * xb            # x blocks
    f += 2 * tm * d_model * xb           # out blocks
    f += tm * d_model * 4                # f32 accumulator scratch
    f += 2 * d_model * tn * wb           # W1^T tile
    f += 2 * tn * d_model * wb           # W2^T tile
    f += 2 * (tn + d_model) * 4          # bias tiles
    f += tm * tn * 4                     # f32 intermediate h
    return f


def _split_rows_for_two_cores(gen, tm, M):
    """On v7x make sure the 'parallel' row axis has >= 2 steps (2 TCs)."""
    if gen != "v7x":
        return tm
    Mp = _round_up(M, tm)
    if Mp // tm >= 2 or M <= 8:
        return tm
    return max(8, _round_up((M + 1) // 2, 8))


# ---------------------------------------------------------------------------
# Wrapper
# ---------------------------------------------------------------------------

def feed_forward(x, w1, b1, w2, b2, *, block_rows=None, block_mid=None,
                 force_tiled=False):
    """x: [..., d_model].
    w1: [d_middle, d_model], b1: [d_middle]   (nn.Linear l1 layout)
    w2: [d_model, d_middle], b2: [d_model]    (nn.Linear l2 layout)
    """
    *lead, d_model = x.shape
    d_middle = w1.shape[0]
    M = 1
    for s in lead:
        M *= s

    gen = _device_generation()
    gen_tm, gen_tn, vmem_budget = _gen_params(gen)
    tm_pref = block_rows if block_rows is not None else gen_tm
    tn_pref = block_mid if block_mid is not None else gen_tn

    xb = jnp.dtype(x.dtype).itemsize
    wb = jnp.dtype(w1.dtype).itemsize

    # Fold batch/seq into the sublane (row) dimension: one big matmul.
    x2 = x.reshape(M, d_model)
    # Pre-transpose weights so the kernel does plain x @ W.
    w1t = w1.T                       # [d_model, d_middle]
    w2t = w2.T                       # [d_middle, d_model]
    b1r = b1.reshape(1, d_middle)
    b2r = b2.reshape(1, d_model)

    # Row tile: largest multiple of 8 <= preference, capped by (padded) M.
    tm = min(_round_up(tm_pref, 8), _round_up(M, 8))

    total_flops = 4 * M * d_middle * d_model  # two matmuls, 2 FLOP per MAC
    io_bytes = M * d_model * xb * 2           # x read + out write

    # ---------------- Fast path: weights fully resident in VMEM -------------
    resident_fp = _resident_footprint(tm, d_model, d_middle, xb, wb)
    if not force_tiled and resident_fp <= int(0.9 * vmem_budget):
        tm = _split_rows_for_two_cores(gen, tm, M)
        resident_fp = _resident_footprint(tm, d_model, d_middle, xb, wb)
        Mp = _round_up(M, tm)
        x_in = x2 if Mp == M else jnp.pad(x2, ((0, Mp - M), (0, 0)))

        vmem_limit = int(min(vmem_budget,
                             max(int(resident_fp * 1.3), 8 * 1024 * 1024)))
        cost = pl.CostEstimate(
            flops=total_flops, transcendentals=0,
            bytes_accessed=io_bytes + 2 * d_model * d_middle * wb)

        out = pl.pallas_call(
            _ffn_resident_kernel,
            out_shape=jax.ShapeDtypeStruct((Mp, d_model), x.dtype),
            grid_spec=pltpu.PrefetchScalarGridSpec(
                num_scalar_prefetch=0,
                grid=(Mp // tm,),
                in_specs=[
                    pl.BlockSpec((tm, d_model), lambda i: (i, 0)),        # x
                    pl.BlockSpec((d_model, d_middle), lambda i: (0, 0)),  # W1^T
                    pl.BlockSpec((1, d_middle), lambda i: (0, 0)),        # b1
                    pl.BlockSpec((d_middle, d_model), lambda i: (0, 0)),  # W2^T
                    pl.BlockSpec((1, d_model), lambda i: (0, 0)),         # b2
                ],
                out_specs=pl.BlockSpec((tm, d_model), lambda i: (i, 0)),
            ),
            compiler_params=pltpu.CompilerParams(
                dimension_semantics=("parallel",),
                vmem_limit_bytes=vmem_limit),
            cost_estimate=cost,
        )(x_in, w1t, b1r, w2t, b2r)
        return out[:M].reshape(*lead, d_model)

    # ---------------- Tiled path: reduce over d_middle tiles ---------------
    # Hidden tile must be a multiple of 128 (lane) or the full dimension.
    if d_middle <= tn_pref:
        tn = d_middle
    else:
        tn = max(128, (tn_pref // 128) * 128)

    # Shrink tiles until the block footprint fits the per-generation budget.
    while _tiled_footprint(tm, tn, d_model, xb, wb) > vmem_budget:
        if tm > 64:
            tm = max(64, _round_up(tm // 2, 8))
        elif tn > 128 and tn % 128 == 0:
            tn = max(128, tn // 2)
        else:
            break

    tm = _split_rows_for_two_cores(gen, tm, M)

    Mp = _round_up(M, tm)
    Kp = _round_up(d_middle, tn)

    x_in = x2 if Mp == M else jnp.pad(x2, ((0, Mp - M), (0, 0)))
    if Kp != d_middle:
        # Zero-padding the hidden axis is inert: relu(0)=0 and the padded
        # W2^T rows are zero, so they contribute nothing to the output.
        w1t = jnp.pad(w1t, ((0, 0), (0, Kp - d_middle)))
        b1r = jnp.pad(b1r, ((0, 0), (0, Kp - d_middle)))
        w2t = jnp.pad(w2t, ((0, Kp - d_middle), (0, 0)))

    grid = (Mp // tm, Kp // tn)
    tiled_fp = _tiled_footprint(tm, tn, d_model, xb, wb)
    vmem_limit = int(min(vmem_budget,
                         max(int(tiled_fp * 1.3), 8 * 1024 * 1024)))
    cost = pl.CostEstimate(
        flops=total_flops, transcendentals=0,
        bytes_accessed=io_bytes + grid[0] * 2 * d_model * Kp * wb)

    out = pl.pallas_call(
        _ffn_tiled_kernel,
        out_shape=jax.ShapeDtypeStruct((Mp, d_model), x.dtype),
        grid_spec=pltpu.PrefetchScalarGridSpec(
            num_scalar_prefetch=0,
            grid=grid,
            in_specs=[
                pl.BlockSpec((tm, d_model), lambda i, n: (i, 0)),   # x rows
                pl.BlockSpec((d_model, tn), lambda i, n: (0, n)),   # W1^T cols
                pl.BlockSpec((1, tn), lambda i, n: (0, n)),         # b1 slice
                pl.BlockSpec((tn, d_model), lambda i, n: (n, 0)),   # W2^T rows
                pl.BlockSpec((1, d_model), lambda i, n: (0, 0)),    # b2
            ],
            out_specs=pl.BlockSpec((tm, d_model), lambda i, n: (i, 0)),
            scratch_shapes=[pltpu.VMEM((tm, d_model), jnp.float32)],
        ),
        compiler_params=pltpu.CompilerParams(
            dimension_semantics=("parallel", "arbitrary"),
            vmem_limit_bytes=vmem_limit),
        cost_estimate=cost,
    )(x_in, w1t, b1r, w2t, b2r)
    return out[:M].reshape(*lead, d_model)


# ---------------------------------------------------------------------------
# Reference & test
# ---------------------------------------------------------------------------

def _reference(x, w1, b1, w2, b2):
    h = jnp.maximum(x @ w1.T + b1, 0.0)
    return h @ w2.T + b2


if __name__ == "__main__":
    # Small shapes consistent with the module's forward.
    B, S, d_model, d_middle = 2, 8, 64, 256

    key = jax.random.PRNGKey(0)
    kx, kw1, kb1, kw2, kb2 = jax.random.split(key, 5)

    x = jax.random.normal(kx, (B, S, d_model), jnp.float32)

    # Deterministic parameter init (nn.Linear layout: [out_feat, in_feat]).
    lim1 = 1.0 / math.sqrt(d_model)
    lim2 = 1.0 / math.sqrt(d_middle)
    w1 = jax.random.uniform(kw1, (d_middle, d_model), jnp.float32, -lim1, lim1)
    b1 = jax.random.uniform(kb1, (d_middle,), jnp.float32, -lim1, lim1)
    w2 = jax.random.uniform(kw2, (d_model, d_middle), jnp.float32, -lim2, lim2)
    b2 = jax.random.uniform(kb2, (d_model,), jnp.float32, -lim2, lim2)

    ref = _reference(x, w1, b1, w2, b2)

    # Default path: weights fully resident in VMEM for these small shapes.
    out = jax.block_until_ready(feed_forward(x, w1, b1, w2, b2))
    assert out.shape == (B, S, d_model)
    assert jnp.allclose(out, ref, atol=1e-5, rtol=1e-5), "resident path mismatch"

    # Forced tiled path: exercises the hidden-axis reduction (two 128 tiles)
    # with the pl.when-gated f32 accumulator.
    out_t = jax.block_until_ready(
        feed_forward(x, w1, b1, w2, b2, block_mid=128, force_tiled=True))
    assert jnp.allclose(out_t, ref, atol=1e-5, rtol=1e-5), "tiled path mismatch"

    print("KERNEL_OK")
</pallas_src>

<mosaic_0001>
module attributes {stable_mosaic.version = 11 : i64} {
  func.func @_ffn_resident_kernel(%arg0: i32, %arg1: memref<16x64xf32, #tpu.memory_space<vmem>>, %arg2: memref<64x256xf32, #tpu.memory_space<vmem>>, %arg3: memref<1x256xf32, #tpu.memory_space<vmem>>, %arg4: memref<256x64xf32, #tpu.memory_space<vmem>>, %arg5: memref<1x64xf32, #tpu.memory_space<vmem>>, %arg6: memref<16x64xf32, #tpu.memory_space<vmem>>) attributes {dimension_semantics = [#tpu.dimension_semantics<parallel>], iteration_bounds = array<i64: 1>, scalar_prefetch = 0 : i64, scratch_operands = 0 : i64, tpu.core_type = #tpu.core_type<tc>, window_params = [{transform_indices = @transform_0, window_bounds = array<i64: 16, 64>}, {pipeline_mode = #tpu.pipeline_mode<synchronous>, transform_indices = @transform_1, window_bounds = array<i64: 64, 256>}, {pipeline_mode = #tpu.pipeline_mode<synchronous>, transform_indices = @transform_2, window_bounds = array<i64: 1, 256>}, {pipeline_mode = #tpu.pipeline_mode<synchronous>, transform_indices = @transform_3, window_bounds = array<i64: 256, 64>}, {pipeline_mode = #tpu.pipeline_mode<synchronous>, transform_indices = @transform_4, window_bounds = array<i64: 1, 64>}, {transform_indices = @transform_5, window_bounds = array<i64: 16, 64>}]} {
    %c0 = arith.constant 0 : index
    %c0_0 = arith.constant 0 : index
    %0 = vector.load %arg1[%c0, %c0_0] : memref<16x64xf32, #tpu.memory_space<vmem>>, vector<16x64xf32>
    %c0_1 = arith.constant 0 : index
    %c0_2 = arith.constant 0 : index
    %1 = vector.load %arg2[%c0_1, %c0_2] : memref<64x256xf32, #tpu.memory_space<vmem>>, vector<64x256xf32>
    %cst = arith.constant dense<0.000000e+00> : vector<16x256xf32>
    %2 = tpu.matmul %0, %1, %cst {dimension_numbers = #tpu.dot_dimension_numbers<[1], [0], [0], [1], [0, 0, 1, 1], [], []>} : vector<16x64xf32>, vector<64x256xf32>, vector<16x256xf32> -> vector<16x256xf32>
    %c0_3 = arith.constant 0 : index
    %c0_4 = arith.constant 0 : index
    %3 = vector.load %arg3[%c0_3, %c0_4] : memref<1x256xf32, #tpu.memory_space<vmem>>, vector<1x256xf32>
    %4 = vector.broadcast %3 : vector<1x256xf32> to vector<16x256xf32>
    %5 = arith.addf %2, %4 : vector<16x256xf32>
    %cst_5 = arith.constant 0.000000e+00 : f32
    %6 = vector.broadcast %cst_5 : f32 to vector<16x256xf32>
    %7 = arith.maximumf %5, %6 : vector<16x256xf32>
    %c0_6 = arith.constant 0 : index
    %c0_7 = arith.constant 0 : index
    %8 = vector.load %arg4[%c0_6, %c0_7] : memref<256x64xf32, #tpu.memory_space<vmem>>, vector<256x64xf32>
    %cst_8 = arith.constant dense<0.000000e+00> : vector<16x64xf32>
    %9 = tpu.matmul %7, %8, %cst_8 {dimension_numbers = #tpu.dot_dimension_numbers<[1], [0], [0], [1], [0, 0, 1, 1], [], []>} : vector<16x256xf32>, vector<256x64xf32>, vector<16x64xf32> -> vector<16x64xf32>
    %c0_9 = arith.constant 0 : index
    %c0_10 = arith.constant 0 : index
    %10 = vector.load %arg5[%c0_9, %c0_10] : memref<1x64xf32, #tpu.memory_space<vmem>>, vector<1x64xf32>
    %11 = vector.broadcast %10 : vector<1x64xf32> to vector<16x64xf32>
    %12 = arith.addf %9, %11 : vector<16x64xf32>
    %c0_11 = arith.constant 0 : index
    %c0_12 = arith.constant 0 : index
    %13 = vector.load %arg6[%c0_11, %c0_12] : memref<16x64xf32, #tpu.memory_space<vmem>>, vector<16x64xf32>
    tpu.vector_store %arg6[%c0_11, %c0_12], %12 {strides = array<i32>} : memref<16x64xf32, #tpu.memory_space<vmem>>, vector<16x64xf32>,
    return
  }
  func.func @transform_0(%arg0: i32) -> (i32, i32) {
    %c0_i32 = arith.constant 0 : i32
    %c0_i32_0 = arith.constant 0 : i32
    return %arg0, %c0_i32 : i32, i32
  }
  func.func @transform_1(%arg0: i32) -> (i32, i32) {
    %c0_i32 = arith.constant 0 : i32
    %c0_i32_0 = arith.constant 0 : i32
    %c0_i32_1 = arith.constant 0 : i32
    return %c0_i32, %c0_i32_0 : i32, i32
  }
  func.func @transform_2(%arg0: i32) -> (i32, i32) {
    %c0_i32 = arith.constant 0 : i32
    %c0_i32_0 = arith.constant 0 : i32
    %c0_i32_1 = arith.constant 0 : i32
    return %c0_i32, %c0_i32_0 : i32, i32
  }
  func.func @transform_3(%arg0: i32) -> (i32, i32) {
    %c0_i32 = arith.constant 0 : i32
    %c0_i32_0 = arith.constant 0 : i32
    %c0_i32_1 = arith.constant 0 : i32
    return %c0_i32, %c0_i32_0 : i32, i32
  }
  func.func @transform_4(%arg0: i32) -> (i32, i32) {
    %c0_i32 = arith.constant 0 : i32
    %c0_i32_0 = arith.constant 0 : i32
    %c0_i32_1 = arith.constant 0 : i32
    return %c0_i32, %c0_i32_0 : i32, i32
  }
  func.func @transform_5(%arg0: i32) -> (i32, i32) {
    %c0_i32 = arith.constant 0 : i32
    %c0_i32_0 = arith.constant 0 : i32
    return %arg0, %c0_i32 : i32, i32
  }
}

</mosaic_0001>

<llo_original>
// kernel: tpu_custom_call.1
$region0: #{tpu_custom_call.1}
  #allocation0 [shape = 'u32[]', space=smem, size = 0x4, offset = 0x4, fixed_abs, tag = 'smem constant byte address 0x4 - core index']
  #allocation1 [shape = 'u32[72,128]{1,0:T(1,128)}', space=vmem, size = 0x9000, scoped, tag = 'internal scratch']
  %s0 = inlined_call_operand.vmem [shape: f32[16,64], index: 0, kind: input, shape index: {}]
  %s1 = inlined_call_operand.vmem [shape: f32[64,256], index: 1, kind: input, shape index: {}]
  %s2 = inlined_call_operand.vmem [shape: f32[1,256], index: 2, kind: input, shape index: {}]
  %s3 = inlined_call_operand.vmem [shape: f32[256,64], index: 3, kind: input, shape index: {}]
  %s4 = inlined_call_operand.vmem [shape: f32[1,64], index: 4, kind: input, shape index: {}]
  %s5 = inlined_call_operand.hbm [shape: f32[16,64], index: 5, kind: output, shape index: {}]
  %s6 = sld [smem:[#allocation0]]
  $region30: #{tpu_custom_call.1} parent=0
    _
  %s8 = ssub.s32 1, %s6
  %s9 = scalar_select 0, %s8, %s6
  $region1: #{tpu_custom_call.1} parent=0
    #allocation2 [shape = 'u8[8192]{0}', space=vmem, size = 0x2000, scoped, tag = 'output window, operand 0, single buffered']
    #allocation3 [shape = 's32[1]{0}', space=sflag, size = 0x4, scoped, tag = 'scoped memory for tpu_custom_call.1']
    %10 = vsyncpa [#allocation3], 0
    // Predicated region
    $region2: #{tpu_custom_call.1} parent=1 // pred_check
      _
    $region3: #{tpu_custom_call.1} parent=1 // pred_check_branch
      %12 = sbr.rel (0) target = $region5
    $region4: #{tpu_custom_call.1} parent=1 // pred_region
      _
    $region5: #{tpu_custom_call.1} parent=1 // pred_fallthru
      _
    // Predicated region
    $region6: #{tpu_custom_call.1} parent=1 // pred_check
      _
    $region7: #{tpu_custom_call.1} parent=1 // pred_check_branch
      %14 = sbr.rel (0) target = $region9
    $region8: #{tpu_custom_call.1} parent=1 // pred_region
      _
    $region9: #{tpu_custom_call.1} parent=1 // pred_fallthru
      _
    // Predicated region
    $region10: #{tpu_custom_call.1} parent=1 // pred_check
      _
    $region11: #{tpu_custom_call.1} parent=1 // pred_check_branch
      %16 = sbr.rel (0) target = $region13
    $region12: #{tpu_custom_call.1} parent=1 // pred_region
      _
    $region13: #{tpu_custom_call.1} parent=1 // pred_fallthru
      _
    // Predicated region
    $region14: #{tpu_custom_call.1} parent=1 // pred_check
      _
    $region15: #{tpu_custom_call.1} parent=1 // pred_check_branch
      %18 = sbr.rel (0) target = $region17
    $region16: #{tpu_custom_call.1} parent=1 // pred_region
      _
    $region17: #{tpu_custom_call.1} parent=1 // pred_fallthru
      _
    // Predicated region
    $region18: #{tpu_custom_call.1} parent=1 // pred_check
      _
    $region19: #{tpu_custom_call.1} parent=1 // pred_check_branch
      %20 = sbr.rel (0) target = $region21
    $region20: #{tpu_custom_call.1} parent=1 // pred_region
      _
    $region21: #{tpu_custom_call.1} parent=1 // pred_fallthru
      _
    %v21 = vld [vmem:[%s0] sm:$0xff]
    %v22 = vld [vmem:[%s0 + $0x8] sm:$0xff]
    %v23 = vld [vmem:[%s1] sm:$0xff]
    %v24 = vld [vmem:[%s1 + $0x8] sm:$0xff]
    %v25 = vld [vmem:[%s1 + $0x10] sm:$0xff]
    %v26 = vld [vmem:[%s1 + $0x18] sm:$0xff]
    %v27 = vld [vmem:[%s1 + $0x20] sm:$0xff]
    %v28 = vld [vmem:[%s1 + $0x28] sm:$0xff]
    %v29 = vld [vmem:[%s1 + $0x30] sm:$0xff]
    %v30 = vld [vmem:[%s1 + $0x38] sm:$0xff]
    %v31 = vld [vmem:[%s1 + $0x40] sm:$0xff]
    %v32 = vld [vmem:[%s1 + $0x48] sm:$0xff]
    %v33 = vld [vmem:[%s1 + $0x50] sm:$0xff]
    %v34 = vld [vmem:[%s1 + $0x58] sm:$0xff]
    %v35 = vld [vmem:[%s1 + $0x60] sm:$0xff]
    %v36 = vld [vmem:[%s1 + $0x68] sm:$0xff]
    %v37 = vld [vmem:[%s1 + $0x70] sm:$0xff]
    %v38 = vld [vmem:[%s1 + $0x78] sm:$0xff]
    %v39 = vld [vmem:[%s2] sm:$0x3]
    %v41 = vperm.slane %v39, 0
    %v42 = vperm.slane %v39, 1
    %vm45 = vcmask 523264
    %v47 = vsel %vm45, %v21, 0
    %v50 = vsel %vm45, %v22, 0
    %52 = vmatpush.msra.mxu0 0.0
    %53 = vmatpush.msra.mxu0 0.0
    %54 = vmatpush.msra.mxu0 0.0
    %55 = vmatpush.msra.mxu0 0.0
    %56 = vmatpush.msra.mxu0 0.0
    %57 = vmatpush.msra.mxu0 0.0
    %58 = vmatpush.msra.mxu0 0.0
    %59 = vmatpush.msra.mxu0 0.0
    %60 = vmatpush.msra.mxu0 %v37
    %61 = vmatpush.msra.mxu0 %v35
    %62 = vmatpush.msra.mxu0 %v33
    %63 = vmatpush.msra.mxu0 %v31
    %64 = vmatpush.msra.mxu0 %v29
    %65 = vmatpush.msra.mxu0 %v27
    %66 = vmatpush.msra.mxu0 %v25
    %67 = vmatpush.msra.mxu0 %v23
    %68 = vmatmul.f32.gmra.mxu0 %v47
    %v69 = vpop.f32.mrf.mxu0
    %v70 = vadd.f32 %v41, %v69
    %71 = vmatmul.f32.gmra.mxu0 %v50
    %v72 = vpop.f32.mrf.mxu0
    %v73 = vadd.f32 %v41, %v72
    %74 = vdwg.mxu0
    %75 = vmatpush.msra.mxu0 0.0
    %76 = vmatpush.msra.mxu0 0.0
    %77 = vmatpush.msra.mxu0 0.0
    %78 = vmatpush.msra.mxu0 0.0
    %79 = vmatpush.msra.mxu0 0.0
    %80 = vmatpush.msra.mxu0 0.0
    %81 = vmatpush.msra.mxu0 0.0
    %82 = vmatpush.msra.mxu0 0.0
    %83 = vmatpush.msra.mxu0 %v38
    %84 = vmatpush.msra.mxu0 %v36
    %85 = vmatpush.msra.mxu0 %v34
    %86 = vmatpush.msra.mxu0 %v32
    %87 = vmatpush.msra.mxu0 %v30
    %88 = vmatpush.msra.mxu0 %v28
    %89 = vmatpush.msra.mxu0 %v26
    %90 = vmatpush.msra.mxu0 %v24
    %91 = vmatmul.f32.gmra.mxu0 %v47
    %v92 = vpop.f32.mrf.mxu0
    %v93 = vadd.f32 %v42, %v92
    %94 = vmatmul.f32.gmra.mxu0 %v50
    %v95 = vpop.f32.mrf.mxu0
    %v96 = vadd.f32 %v42, %v95
    %97 = vdwg.mxu0
    %v98 = vmax.f32 %v70, 0.0
    %v99 = vmax.f32 %v93, 0.0
    %v100 = vmax.f32 %v73, 0.0
    %v101 = vmax.f32 %v96, 0.0
    %v102 = vld [vmem:[%s3] sm:$0xff]
    %v103 = vld [vmem:[%s3 + $0x8] sm:$0xff]
    %v104 = vld [vmem:[%s3 + $0x10] sm:$0xff]
    %v105 = vld [vmem:[%s3 + $0x18] sm:$0xff]
    %v106 = vld [vmem:[%s3 + $0x20] sm:$0xff]
    %v107 = vld [vmem:[%s3 + $0x28] sm:$0xff]
    %v108 = vld [vmem:[%s3 + $0x30] sm:$0xff]
    %v109 = vld [vmem:[%s3 + $0x38] sm:$0xff]
    %v110 = vld [vmem:[%s3 + $0x40] sm:$0xff]
    %v111 = vld [vmem:[%s3 + $0x48] sm:$0xff]
    %v112 = vld [vmem:[%s3 + $0x50] sm:$0xff]
    %v113 = vld [vmem:[%s3 + $0x58] sm:$0xff]
    %v114 = vld [vmem:[%s3 + $0x60] sm:$0xff]
    %v115 = vld [vmem:[%s3 + $0x68] sm:$0xff]
    %v116 = vld [vmem:[%s3 + $0x70] sm:$0xff]
    %v117 = vld [vmem:[%s3 + $0x78] sm:$0xff]
    %v118 = vld [vmem:[%s3 + $0x80] sm:$0xff]
    %v119 = vld [vmem:[%s3 + $0x88] sm:$0xff]
    %v120 = vld [vmem:[%s3 + $0x90] sm:$0xff]
    %v121 = vld [vmem:[%s3 + $0x98] sm:$0xff]
    %v122 = vld [vmem:[%s3 + $0xa0] sm:$0xff]
    %v123 = vld [vmem:[%s3 + $0xa8] sm:$0xff]
    %v124 = vld [vmem:[%s3 + $0xb0] sm:$0xff]
    %v125 = vld [vmem:[%s3 + $0xb8] sm:$0xff]
    %v126 = vld [vmem:[%s3 + $0xc0] sm:$0xff]
    %v127 = vld [vmem:[%s3 + $0xc8] sm:$0xff]
    %v128 = vld [vmem:[%s3 + $0xd0] sm:$0xff]
    %v129 = vld [vmem:[%s3 + $0xd8] sm:$0xff]
    %v130 = vld [vmem:[%s3 + $0xe0] sm:$0xff]
    %v131 = vld [vmem:[%s3 + $0xe8] sm:$0xff]
    %v132 = vld [vmem:[%s3 + $0xf0] sm:$0xff]
    %v133 = vld [vmem:[%s3 + $0xf8] sm:$0xff]
    %v134 = vld [vmem:[%s4] sm:$0x1]
    %v136 = vperm.slane %v134, 0
    %138 = vmatpush.msra.mxu0 %v117
    %139 = vmatpush.msra.mxu0 %v116
    %140 = vmatpush.msra.mxu0 %v115
    %141 = vmatpush.msra.mxu0 %v114
    %142 = vmatpush.msra.mxu0 %v113
    %143 = vmatpush.msra.mxu0 %v112
    %144 = vmatpush.msra.mxu0 %v111
    %145 = vmatpush.msra.mxu0 %v110
    %146 = vmatpush.msra.mxu0 %v109
    %147 = vmatpush.msra.mxu0 %v108
    %148 = vmatpush.msra.mxu0 %v107
    %149 = vmatpush.msra.mxu0 %v106
    %150 = vmatpush.msra.mxu0 %v105
    %151 = vmatpush.msra.mxu0 %v104
    %152 = vmatpush.msra.mxu0 %v103
    %153 = vmatpush.msra.mxu0 %v102
    %154 = vmatmul.f32.gmra.mxu0 %v98
    %v155 = vpop.f32.mrf.mxu0
    %v156 = vadd.f32 %v136, %v155
    %157 = vmatmul.f32.gmra.mxu0 %v100
    %v158 = vpop.f32.mrf.mxu0
    %v159 = vadd.f32 %v136, %v158
    %160 = vdwg.mxu0
    %161 = vmatpush.msra.mxu0 %v133
    %162 = vmatpush.msra.mxu0 %v132
    %163 = vmatpush.msra.mxu0 %v131
    %164 = vmatpush.msra.mxu0 %v130
    %165 = vmatpush.msra.mxu0 %v129
    %166 = vmatpush.msra.mxu0 %v128
    %167 = vmatpush.msra.mxu0 %v127
    %168 = vmatpush.msra.mxu0 %v126
    %169 = vmatpush.msra.mxu0 %v125
    %170 = vmatpush.msra.mxu0 %v124
    %171 = vmatpush.msra.mxu0 %v123
    %172 = vmatpush.msra.mxu0 %v122
    %173 = vmatpush.msra.mxu0 %v121
    %174 = vmatpush.msra.mxu0 %v120
    %175 = vmatpush.msra.mxu0 %v119
    %176 = vmatpush.msra.mxu0 %v118
    %177 = vmatmul.f32.gmra.mxu0 %v99
    %v178 = vpop.f32.mrf.mxu0
    %v179 = vadd.f32 %v156, %v178
    %180 = vmatmul.f32.gmra.mxu0 %v101
    %v181 = vpop.f32.mrf.mxu0
    %v182 = vadd.f32 %v159, %v181
    %183 = vdwg.mxu0
    %184 = vst.msk [vmem:[#allocation2] sm:$0xff] %vm45, %v179
    %185 = vst.msk [vmem:[#allocation2 + $0x8] sm:$0xff] %vm45, %v182
    // Predicated region
    $region22: #{tpu_custom_call.1} parent=1 // pred_check
      _
    $region23: #{tpu_custom_call.1} parent=1 // pred_check_branch
      %187 = sbr.rel (0) target = $region25
    $region24: #{tpu_custom_call.1} parent=1 // pred_region
      %189 = vsyncadd [#allocation3], 0
      %s190 = sshll.u32 [#allocation2], 4
      %s191 = int_to_ptr.vmem [resolvable:$true] %s190
      %s192 = sshll.u32 %s5, 4
      %s193 = int_to_ptr.hbm [resolvable:$true] %s192
      %198 = dma.vmem_to_hbm [thread:$0]  %s191, 256, %s193, [#allocation3], 128, 128, 8
    $region25: #{tpu_custom_call.1} parent=1 // pred_fallthru
      _
    // Predicated region
    $region26: #{tpu_custom_call.1} parent=1 // pred_check
      _
    $region27: #{tpu_custom_call.1} parent=1 // pred_check_branch
      %200 = sbr.rel (0) target = $region29
    $region28: #{tpu_custom_call.1} parent=1 // pred_region
      %202 = dma.done [#allocation3], 256
    $region29: #{tpu_custom_call.1} parent=1 // pred_fallthru
      _
    %203 = vsyncpa [#allocation3], 1

</llo_original>
